<compile_context>
chip_gen: v7x
topology: tpu7x:2x2x1
jax: 0.10.0
libtpu: 0.0.40
codegen_flags: <defaults>
</compile_context>

<pallas_src>
import numpy as np

import jax
import jax.numpy as jnp
from jax import lax
from jax.experimental import pallas as pl
from jax.experimental.pallas import tpu as pltpu


def _round_up(x, m):
    return (x + m - 1) // m * m


# ---------------------------------------------------------------------------
# Stage 1: pool each chunk of `chunk_size` rows -> one (D,) row per chunk.
# ---------------------------------------------------------------------------
def _chunk_pool_kernel(pool_method: str, chunk_size: int, tc: int):
    inv_cs = 1.0 / float(chunk_size)

    def kernel(x_ref, o_ref):
        # x_ref: (tc * chunk_size, D) flat rows ; o_ref: (tc, D)
        def row(k):
            # row k of every chunk in the block: strided sublane slice.
            return x_ref[pl.ds(k, tc, stride=chunk_size), :].astype(jnp.float32)

        if chunk_size <= 16:
            acc = row(0)
            for k in range(1, chunk_size):
                acc = acc + row(k)
        else:
            acc = lax.fori_loop(1, chunk_size, lambda k, a: a + row(k), row(0))

        if pool_method == "mean":
            acc = acc * inv_cs
        o_ref[...] = acc.astype(o_ref.dtype)

    return kernel


# ---------------------------------------------------------------------------
# Stage 2: per batch sample, DMA n_peaks[i]-relevant window of the chunk-mean
# table out of HBM and zero-pad to max_n_peaks rows.  TB samples / grid step.
# ---------------------------------------------------------------------------
def _gather_pad_kernel(max_n_peaks: int, tb: int):
    def kernel(ps_ref, np_ref, cm_hbm, o_ref, buf, sem):
        # ps_ref, np_ref: SMEM (B_pad,) int32 scalar-prefetch
        # cm_hbm: (NC_alloc, D) chunk means, left in HBM (pl.ANY)
        # o_ref:  (tb, max_n_peaks, D) output block
        # buf:    VMEM (tb, max_n_peaks, D) landing buffer
        # sem:    DMA semaphores (tb,)
        base = pl.program_id(0) * tb

        # Issue all per-sample window copies first so they overlap.
        for t in range(tb):
            start = ps_ref[base + t]
            pltpu.make_async_copy(
                cm_hbm.at[pl.ds(start, max_n_peaks), :],
                buf.at[t], sem.at[t]).start()

        # Wait for each window, mask rows >= n_peaks[i] to zero, store.
        for t in range(tb):
            start = ps_ref[base + t]
            pltpu.make_async_copy(
                cm_hbm.at[pl.ds(start, max_n_peaks), :],
                buf.at[t], sem.at[t]).wait()
            n = np_ref[base + t]
            rows = buf[t]                                    # (MP, D)
            p_idx = lax.broadcasted_iota(jnp.int32, rows.shape, 0)
            o_ref[t] = jnp.where(p_idx < n, rows,
                                 jnp.zeros_like(rows)).astype(o_ref.dtype)

    return kernel


# ---------------------------------------------------------------------------
# Wrapper
# ---------------------------------------------------------------------------
def split_pool(x, chunk_size, n_peaks, max_n_peaks, pool_method="mean"):
    """x: (B, L, D) -> (B, max_n_peaks, D)."""
    assert pool_method in ("mean", "sum"), (
        # TODO(synk): torch's pool(x, 'max') returns (values, indices) and
        # breaks vstack in the original module; 'max' is not implemented here.
        "only 'mean'/'sum' pooling supported")
    B, L, D = x.shape
    total = B * L
    # TODO(synk): ragged final chunk of torch.split (when B*L % chunk_size != 0)
    # is not handled; require exact division.
    assert total % chunk_size == 0, "B*L must be divisible by chunk_size"
    NC = total // chunk_size
    itemsize = jnp.dtype(x.dtype).itemsize

    x_flat = x.reshape(total, D)

    # --- stage 1 tiling: ~4 MiB input blocks, chunk count multiple of 8 so
    #     both the (TC*chunk_size, D) input and (TC, D) output are sublane
    #     aligned regardless of chunk_size.
    rows_per_block = max(chunk_size, (4 << 20) // max(1, D * itemsize))
    TC = max(1, rows_per_block // chunk_size)
    TC = max(8, (TC // 8) * 8)
    TC = min(TC, _round_up(NC, 8))
    grid1 = pl.cdiv(NC, TC)
    # Over-allocate the chunk table so the fixed-size (max_n_peaks, D) window
    # DMA in stage 2 never goes out of bounds; the extra rows are never valid
    # peaks and are masked to zero in-kernel.
    NC_alloc = grid1 * TC + max_n_peaks

    chunk_means = pl.pallas_call(
        _chunk_pool_kernel(pool_method, chunk_size, TC),
        out_shape=jax.ShapeDtypeStruct((NC_alloc, D), x.dtype),
        grid=(grid1,),
        in_specs=[pl.BlockSpec((TC * chunk_size, D), lambda c: (c, 0))],
        out_specs=pl.BlockSpec((TC, D), lambda c: (c, 0)),
        compiler_params=pltpu.CompilerParams(
            dimension_semantics=("parallel",),
            vmem_limit_bytes=32 * 1024 * 1024),
    )(x_flat)

    # --- host-side scalar bookkeeping (tiny)
    n_peaks_i = jnp.asarray(n_peaks, jnp.int32)
    pool_idx = jnp.cumsum(n_peaks_i + 1)
    pool_start = jnp.concatenate(
        [jnp.zeros((1,), jnp.int32), pool_idx[:-1].astype(jnp.int32)])
    # Clamp so the fixed-size window DMA always stays inside the table
    # (no effect for well-formed inputs; malformed ones are masked anyway).
    pool_start = jnp.clip(pool_start, 0, NC_alloc - max_n_peaks).astype(jnp.int32)

    # --- stage 2: TB samples per grid step
    TB = int(min(8, B))
    grid2 = pl.cdiv(B, TB)
    B_pad = grid2 * TB
    if B_pad > B:
        pool_start = jnp.pad(pool_start, (0, B_pad - B))
        n_peaks_i = jnp.pad(n_peaks_i, (0, B_pad - B))

    out = pl.pallas_call(
        _gather_pad_kernel(max_n_peaks, TB),
        out_shape=jax.ShapeDtypeStruct((B, max_n_peaks, D), x.dtype),
        grid_spec=pltpu.PrefetchScalarGridSpec(
            num_scalar_prefetch=2,
            grid=(grid2,),
            in_specs=[pl.BlockSpec(memory_space=pl.ANY)],   # table stays in HBM
            out_specs=pl.BlockSpec((TB, max_n_peaks, D),
                                   lambda b, ps, npk: (b, 0, 0)),
            scratch_shapes=[pltpu.VMEM((TB, max_n_peaks, D), x.dtype),
                            pltpu.SemaphoreType.DMA((TB,))]),
        compiler_params=pltpu.CompilerParams(
            dimension_semantics=("parallel",),
            vmem_limit_bytes=32 * 1024 * 1024),
    )(pool_start, n_peaks_i, chunk_means)
    return out


# ---------------------------------------------------------------------------
# Pure-JAX/numpy reference matching the PyTorch forward exactly.
# ---------------------------------------------------------------------------
def split_pool_ref(x, chunk_size, n_peaks, max_n_peaks, pool_method="mean"):
    B, L, D = x.shape
    flat = x.reshape(-1, D)
    n_full = flat.shape[0] // chunk_size
    chunks = [flat[c * chunk_size:(c + 1) * chunk_size] for c in range(n_full)]
    rem = flat[n_full * chunk_size:]
    if rem.shape[0] > 0:
        chunks.append(rem)
    if pool_method == "sum":
        cm = jnp.stack([c.sum(0) for c in chunks])
    else:
        cm = jnp.stack([c.mean(0) for c in chunks])
    n_peaks_np = np.asarray(n_peaks)
    pool_idx = np.cumsum(n_peaks_np + 1)
    pool_start = np.concatenate([[0], pool_idx[:-1]])
    pool_end = pool_idx - 1
    rows = []
    for i in range(B):
        pk = cm[int(pool_start[i]):int(pool_end[i])]
        pad = jnp.zeros((max_n_peaks - int(n_peaks_np[i]), D), x.dtype)
        rows.append(jnp.concatenate([pk, pad], axis=0))
    return jnp.stack(rows)


if __name__ == "__main__":
    key = jax.random.PRNGKey(0)

    # Case 1: batch=2, length=16, hidden=32, chunk_size=4
    #         -> 8 chunks total, n_peaks=[3, 2], max_n_peaks=3, mean pooling.
    batch, length, embed_dim = 2, 16, 32
    chunk_size = 4
    n_peaks = jnp.array([3, 2], dtype=jnp.int32)
    max_n_peaks = 3
    x = jax.random.normal(key, (batch, length, embed_dim), jnp.float32)

    out = split_pool(x, chunk_size, n_peaks, max_n_peaks, pool_method="mean")
    out = jax.block_until_ready(out)
    ref = split_pool_ref(x, chunk_size, n_peaks, max_n_peaks, pool_method="mean")
    assert out.shape == (batch, max_n_peaks, embed_dim)
    assert jnp.allclose(out, ref, atol=1e-5, rtol=1e-5), (
        f"mean: max abs diff {jnp.max(jnp.abs(out - ref))}")

    # Case 2: batch=3, sum pooling, exercises masked tail rows of the table.
    batch2 = 3
    n_peaks2 = jnp.array([2, 3, 1], dtype=jnp.int32)
    x2 = jax.random.normal(jax.random.PRNGKey(1),
                           (batch2, length, embed_dim), jnp.float32)
    out2 = split_pool(x2, chunk_size, n_peaks2, max_n_peaks, pool_method="sum")
    out2 = jax.block_until_ready(out2)
    ref2 = split_pool_ref(x2, chunk_size, n_peaks2, max_n_peaks,
                          pool_method="sum")
    assert jnp.allclose(out2, ref2, atol=1e-5, rtol=1e-5), (
        f"sum: max abs diff {jnp.max(jnp.abs(out2 - ref2))}")

    print("KERNEL_OK")
</pallas_src>

<mosaic_0001>
module attributes {stable_mosaic.version = 11 : i64} {
  func.func @kernel(%arg0: i32, %arg1: memref<32x32xf32, #tpu.memory_space<vmem>>, %arg2: memref<8x32xf32, #tpu.memory_space<vmem>>) attributes {dimension_semantics = [#tpu.dimension_semantics<parallel>], iteration_bounds = array<i64: 1>, scalar_prefetch = 0 : i64, scratch_operands = 0 : i64, tpu.core_type = #tpu.core_type<tc>, window_params = [{transform_indices = @transform_0, window_bounds = array<i64: 32, 32>}, {transform_indices = @transform_1, window_bounds = array<i64: 8, 32>}]} {
    %c0 = arith.constant 0 : index
    %c0_0 = arith.constant 0 : index
    %0 = tpu.strided_load %arg1[%c0, %c0_0] {strides = array<i32: 4, 1>} : memref<32x32xf32, #tpu.memory_space<vmem>>, vector<8x32xf32>
    %c1 = arith.constant 1 : index
    %c0_1 = arith.constant 0 : index
    %1 = tpu.strided_load %arg1[%c1, %c0_1] {strides = array<i32: 4, 1>} : memref<32x32xf32, #tpu.memory_space<vmem>>, vector<8x32xf32>
    %2 = arith.addf %0, %1 : vector<8x32xf32>
    %c2 = arith.constant 2 : index
    %c0_2 = arith.constant 0 : index
    %3 = tpu.strided_load %arg1[%c2, %c0_2] {strides = array<i32: 4, 1>} : memref<32x32xf32, #tpu.memory_space<vmem>>, vector<8x32xf32>
    %4 = arith.addf %2, %3 : vector<8x32xf32>
    %c3 = arith.constant 3 : index
    %c0_3 = arith.constant 0 : index
    %5 = tpu.strided_load %arg1[%c3, %c0_3] {strides = array<i32: 4, 1>} : memref<32x32xf32, #tpu.memory_space<vmem>>, vector<8x32xf32>
    %6 = arith.addf %4, %5 : vector<8x32xf32>
    %cst = arith.constant 2.500000e-01 : f32
    %7 = vector.broadcast %cst : f32 to vector<8x32xf32>
    %8 = arith.mulf %6, %7 : vector<8x32xf32>
    %c0_4 = arith.constant 0 : index
    %c0_5 = arith.constant 0 : index
    %9 = vector.load %arg2[%c0_4, %c0_5] : memref<8x32xf32, #tpu.memory_space<vmem>>, vector<8x32xf32>
    tpu.vector_store %arg2[%c0_4, %c0_5], %8 {strides = array<i32>} : memref<8x32xf32, #tpu.memory_space<vmem>>, vector<8x32xf32>,
    return
  }
  func.func @transform_0(%arg0: i32) -> (i32, i32) {
    %c0_i32 = arith.constant 0 : i32
    %c0_i32_0 = arith.constant 0 : i32
    return %arg0, %c0_i32 : i32, i32
  }
  func.func @transform_1(%arg0: i32) -> (i32, i32) {
    %c0_i32 = arith.constant 0 : i32
    %c0_i32_0 = arith.constant 0 : i32
    return %arg0, %c0_i32 : i32, i32
  }
}

</mosaic_0001>

<llo_original>
// kernel: tpu_custom_call.1
$region0: #{tpu_custom_call.1}
  #allocation0 [shape = 'u32[]', space=smem, size = 0x4, offset = 0x4, fixed_abs, tag = 'smem constant byte address 0x4 - core index']
  #allocation1 [shape = 'u32[144,128]{1,0:T(1,128)}', space=vmem, size = 0x12000, scoped, tag = 'internal scratch']
  %s0 = inlined_call_operand.hbm [shape: f32[32,32], index: 0, kind: input, shape index: {}]
  %s1 = inlined_call_operand.hbm [shape: f32[11,32], index: 1, kind: output, shape index: {}]
  %s2 = sld [smem:[#allocation0]]
  $region18: #{tpu_custom_call.1} parent=0
    _
  %s4 = ssub.s32 1, %s2
  %s5 = scalar_select 0, %s4, %s2
  $region1: #{tpu_custom_call.1} parent=0
    #allocation2 [shape = 'u8[16384]{0}', space=vmem, size = 0x4000, scoped, tag = 'input window, operand 0, single buffered']
    #allocation3 [shape = 's32[1]{0}', space=sflag, size = 0x4, scoped, tag = 'scoped memory for tpu_custom_call.1']
    #allocation4 [shape = 's32[1]{0}', space=sflag, size = 0x4, scoped, tag = 'scoped memory for tpu_custom_call.1']
    #allocation5 [shape = 'u8[4096]{0}', space=vmem, size = 0x1000, scoped, tag = 'output window, operand 0, single buffered']
    %6 = vsyncpa [#allocation3], 0
    %7 = vsyncpa [#allocation4], 0
    // Predicated region
    $region2: #{tpu_custom_call.1} parent=1 // pred_check
      _
    $region3: #{tpu_custom_call.1} parent=1 // pred_check_branch
      %9 = sbr.rel (0) target = $region5
    $region4: #{tpu_custom_call.1} parent=1 // pred_region
      %s11 = ssub.s32 512, 512
      %12 = vsyncadd [#allocation3], %s11
      %s13 = sshll.u32 [#allocation2], 4
      %s14 = int_to_ptr.vmem [resolvable:$true] %s13
      %19 = dma.hbm_to_vmem [thread:$0]  %s0, 512, %s14, [#allocation3], 128, 128, 8
    $region5: #{tpu_custom_call.1} parent=1 // pred_fallthru
      _
    // Predicated region
    $region6: #{tpu_custom_call.1} parent=1 // pred_check
      _
    $region7: #{tpu_custom_call.1} parent=1 // pred_check_branch
      %21 = sbr.rel (0) target = $region9
    $region8: #{tpu_custom_call.1} parent=1 // pred_region
      %22 = dma.done [#allocation3], 512
    $region9: #{tpu_custom_call.1} parent=1 // pred_fallthru
      _
    %v23 = vld [vmem:[#allocation2] ss:$4 sm:$0xff]
    %s24 = scalar_lea.vmem [#allocation2], 1
    %v25 = vld [vmem:[%s24] ss:$4 sm:$0xff]
    %v26 = vadd.f32 %v23, %v25
    %s27 = scalar_lea.vmem [#allocation2], 2
    %v28 = vld [vmem:[%s27] ss:$4 sm:$0xff]
    %v29 = vadd.f32 %v26, %v28
    %s30 = scalar_lea.vmem [#allocation2], 3
    %v31 = vld [vmem:[%s30] ss:$4 sm:$0xff]
    %v32 = vadd.f32 %v29, %v31
    %v33 = vmul.f32 %v32, 0.25
    %vm34 = vcmask 261120
    %35 = vst.msk [vmem:[#allocation5] sm:$0xff] %vm34, %v33
    // Predicated region
    $region10: #{tpu_custom_call.1} parent=1 // pred_check
      _
    $region11: #{tpu_custom_call.1} parent=1 // pred_check_branch
      %37 = sbr.rel (0) target = $region13
    $region12: #{tpu_custom_call.1} parent=1 // pred_region
      %s39 = ssub.s32 128, 128
      %40 = vsyncadd [#allocation4], %s39
      %s42 = sshll.u32 [#allocation5], 4
      %s43 = int_to_ptr.vmem [resolvable:$true] %s42
      %45 = dma.vmem_to_hbm [thread:$0]  %s43, 128, %s1, [#allocation4]
    $region13: #{tpu_custom_call.1} parent=1 // pred_fallthru
      _
    // Predicated region
    $region14: #{tpu_custom_call.1} parent=1 // pred_check
      _
    $region15: #{tpu_custom_call.1} parent=1 // pred_check_branch
      %47 = sbr.rel (0) target = $region17
    $region16: #{tpu_custom_call.1} parent=1 // pred_region
      %48 = dma.done [#allocation4], 128
    $region17: #{tpu_custom_call.1} parent=1 // pred_fallthru
      _
    %49 = vsyncpa [#allocation3], 1
    %50 = vsyncpa [#allocation4], 1

</llo_original>
